<compile_context>
chip_gen: v7x
topology: tpu7x:2x2x1
jax: 0.10.0
libtpu: 0.0.40
codegen_flags: <defaults>
</compile_context>

<pallas_src>
import functools

import jax
import jax.numpy as jnp
from jax.experimental import pallas as pl
from jax.experimental.pallas import tpu as pltpu

_LN_EPS = 1e-5  # PyTorch nn.LayerNorm default


def _layer_norm(x, gamma, beta, eps=_LN_EPS):
    mu = jnp.mean(x, axis=-1, keepdims=True)
    xc = x - mu
    var = jnp.mean(xc * xc, axis=-1, keepdims=True)
    return xc * jax.lax.rsqrt(var + eps) * gamma + beta


# --------------------------------------------------------------------------
# Kernel 1: LayerNorm1 + fused QKV projection (scale pre-folded into W_q/b_q)
# grid = (B, row_tiles); both axes parallel.
# --------------------------------------------------------------------------
def ln_qkv_kernel(x_ref, g_ref, b_ref, w_ref, bias_ref, qkv_ref):
    x = x_ref[0].astype(jnp.float32)                       # (tr, C)
    xn = _layer_norm(x, g_ref[0], b_ref[0])
    qkv = jnp.dot(xn.astype(jnp.bfloat16), w_ref[...],     # bf16 x bf16 -> f32
                  preferred_element_type=jnp.float32) + bias_ref[0]
    qkv_ref[0] = qkv.astype(qkv_ref.dtype)                 # store bf16 (lane-dense 3C)


# --------------------------------------------------------------------------
# Kernel 2: flash-style attention over KV tiles + out-proj + residual +
#           LayerNorm2 + MLP(GELU) + residual.
# grid = (B, q_tiles, kv_tiles); kv axis is the (innermost) reduction axis.
# --------------------------------------------------------------------------
def attn_mlp_kernel(x_ref, q_ref, k_ref, v_ref,
                    pw_ref, pb_ref, g2_ref, b2_ref,
                    w1_ref, b1_ref, w2_ref, b2m_ref,
                    o_ref,
                    m_sc, l_sc, acc_sc,
                    *, num_heads):
    j = pl.program_id(2)

    @pl.when(j == 0)
    def _():
        m_sc[...] = jnp.full_like(m_sc, -jnp.inf)
        l_sc[...] = jnp.zeros_like(l_sc)
        acc_sc[...] = jnp.zeros_like(acc_sc)

    q = q_ref[0]                                           # (nh, tq, hd) bf16, pre-scaled
    k = k_ref[0]                                           # (nh, tk, hd) bf16
    v = v_ref[0]                                           # (nh, tk, hd) bf16

    # online softmax over KV tiles (all softmax math in f32)
    s = jnp.einsum('hqd,hkd->hqk', q, k,
                   preferred_element_type=jnp.float32)     # (nh, tq, tk)
    m_prev = m_sc[...]
    m_new = jnp.maximum(m_prev, jnp.max(s, axis=-1, keepdims=True))
    alpha = jnp.exp(m_prev - m_new)
    p = jnp.exp(s - m_new)
    l_sc[...] = alpha * l_sc[...] + jnp.sum(p, axis=-1, keepdims=True)
    acc_sc[...] = alpha * acc_sc[...] + jnp.einsum(
        'hqk,hkd->hqd', p.astype(jnp.bfloat16), v,
        preferred_element_type=jnp.float32)
    m_sc[...] = m_new

    @pl.when(j == pl.num_programs(2) - 1)
    def _():
        # normalize with approx reciprocal (EUP slot)
        o = acc_sc[...] * pl.reciprocal(l_sc[...], approx=True)   # (nh, tq, hd) f32
        tq = o.shape[1]
        C = x_ref.shape[-1]
        x = x_ref[0].astype(jnp.float32)                   # (tq, C) residual base

        # output projection: sum_h o_h @ W_proj[h]  (no lane-dim concat)
        y = jnp.zeros((tq, C), jnp.float32)
        for h in range(num_heads):
            y = y + jnp.dot(o[h].astype(jnp.bfloat16), pw_ref[h],
                            preferred_element_type=jnp.float32)
        x1 = x + y + pb_ref[0]

        # LayerNorm2 + MLP (Linear -> GELU(erf) -> Linear) + residual
        xn2 = _layer_norm(x1, g2_ref[0], b2_ref[0])
        h1 = jnp.dot(xn2.astype(jnp.bfloat16), w1_ref[...],
                     preferred_element_type=jnp.float32) + b1_ref[0]
        h1 = jax.nn.gelu(h1, approximate=False)            # matches nn.GELU() default
        h2 = jnp.dot(h1.astype(jnp.bfloat16), w2_ref[...],
                     preferred_element_type=jnp.float32) + b2m_ref[0]
        o_ref[0] = (x1 + h2).astype(o_ref.dtype)


# --------------------------------------------------------------------------
# Wrapper
# --------------------------------------------------------------------------
def block_forward(x, params, num_heads, *, row_tile=None, q_tile=None, kv_tile=None):
    """x: (B, H, W, C) float32. params from prepare_params(). Returns (B, H, W, C)."""
    B, H, W, C = x.shape
    N = H * W
    assert C % num_heads == 0
    hd = C // num_heads
    M = params["mlp_w1"].shape[1]

    row_tile = row_tile or min(N, 512)
    q_tile = q_tile or min(N, 128)
    kv_tile = kv_tile or min(N, 512)
    for t in (row_tile, q_tile, kv_tile):
        assert N % t == 0 and t % 8 == 0

    xf = x.reshape(B, N, C)
    vmem_limit = 64 * 1024 * 1024  # above default scoped limit; fits all generations

    # ---- kernel 1: LN1 + QKV -------------------------------------------
    qkv = pl.pallas_call(
        ln_qkv_kernel,
        out_shape=jax.ShapeDtypeStruct((B, N, 3 * C), jnp.bfloat16),
        grid=(B, N // row_tile),
        in_specs=[
            pl.BlockSpec((1, row_tile, C), lambda b, r: (b, r, 0)),
            pl.BlockSpec((1, C), lambda b, r: (0, 0)),
            pl.BlockSpec((1, C), lambda b, r: (0, 0)),
            pl.BlockSpec((C, 3 * C), lambda b, r: (0, 0)),
            pl.BlockSpec((1, 3 * C), lambda b, r: (0, 0)),
        ],
        out_specs=pl.BlockSpec((1, row_tile, 3 * C), lambda b, r: (b, r, 0)),
        compiler_params=pltpu.CompilerParams(
            dimension_semantics=("parallel", "parallel"),
            vmem_limit_bytes=vmem_limit),
    )(xf, params["ln1_g"], params["ln1_b"], params["qkv_w"], params["qkv_b"])

    # head split (layout plumbing outside the kernel): (B,N,3C)->(3,B,nh,N,hd)
    qkv_h = qkv.reshape(B, N, 3, num_heads, hd).transpose(2, 0, 3, 1, 4)
    q, k, v = qkv_h[0], qkv_h[1], qkv_h[2]

    # ---- kernel 2: attention + proj + residual + LN2 + MLP + residual ---
    out = pl.pallas_call(
        functools.partial(attn_mlp_kernel, num_heads=num_heads),
        out_shape=jax.ShapeDtypeStruct((B, N, C), x.dtype),
        grid=(B, N // q_tile, N // kv_tile),
        in_specs=[
            pl.BlockSpec((1, q_tile, C), lambda b, i, j: (b, i, 0)),              # x residual
            pl.BlockSpec((1, num_heads, q_tile, hd), lambda b, i, j: (b, 0, i, 0)),  # q
            pl.BlockSpec((1, num_heads, kv_tile, hd), lambda b, i, j: (b, 0, j, 0)),  # k (streamed)
            pl.BlockSpec((1, num_heads, kv_tile, hd), lambda b, i, j: (b, 0, j, 0)),  # v (streamed)
            pl.BlockSpec((num_heads, hd, C), lambda b, i, j: (0, 0, 0)),          # proj_w per head
            pl.BlockSpec((1, C), lambda b, i, j: (0, 0)),                         # proj_b
            pl.BlockSpec((1, C), lambda b, i, j: (0, 0)),                         # ln2_g
            pl.BlockSpec((1, C), lambda b, i, j: (0, 0)),                         # ln2_b
            pl.BlockSpec((C, M), lambda b, i, j: (0, 0)),                         # mlp_w1
            pl.BlockSpec((1, M), lambda b, i, j: (0, 0)),                         # mlp_b1
            pl.BlockSpec((M, C), lambda b, i, j: (0, 0)),                         # mlp_w2
            pl.BlockSpec((1, C), lambda b, i, j: (0, 0)),                         # mlp_b2
        ],
        out_specs=pl.BlockSpec((1, q_tile, C), lambda b, i, j: (b, i, 0)),
        scratch_shapes=[
            pltpu.VMEM((num_heads, q_tile, 1), jnp.float32),    # running max
            pltpu.VMEM((num_heads, q_tile, 1), jnp.float32),    # running denom
            pltpu.VMEM((num_heads, q_tile, hd), jnp.float32),   # output accumulator
        ],
        compiler_params=pltpu.CompilerParams(
            dimension_semantics=("parallel", "parallel", "arbitrary"),
            vmem_limit_bytes=vmem_limit),
    )(xf, q, k, v,
      params["proj_wh"], params["proj_b"],
      params["ln2_g"], params["ln2_b"],
      params["mlp_w1"], params["mlp_b1"],
      params["mlp_w2"], params["mlp_b2"])
    return out.reshape(B, H, W, C)


# --------------------------------------------------------------------------
# Parameter construction / one-time prep (scale folding + bf16 weight cast)
# --------------------------------------------------------------------------
def init_params(key, dim, mlp_dim):
    ks = jax.random.split(key, 8)
    std = 0.02
    return {
        "ln1_g": jnp.ones((1, dim), jnp.float32),
        "ln1_b": jnp.zeros((1, dim), jnp.float32),
        "qkv_w": std * jax.random.normal(ks[0], (dim, 3 * dim), jnp.float32),
        "qkv_b": std * jax.random.normal(ks[1], (1, 3 * dim), jnp.float32),
        "proj_w": std * jax.random.normal(ks[2], (dim, dim), jnp.float32),
        "proj_b": std * jax.random.normal(ks[3], (1, dim), jnp.float32),
        "ln2_g": jnp.ones((1, dim), jnp.float32),
        "ln2_b": jnp.zeros((1, dim), jnp.float32),
        "mlp_w1": std * jax.random.normal(ks[4], (dim, mlp_dim), jnp.float32),
        "mlp_b1": std * jax.random.normal(ks[5], (1, mlp_dim), jnp.float32),
        "mlp_w2": std * jax.random.normal(ks[6], (mlp_dim, dim), jnp.float32),
        "mlp_b2": std * jax.random.normal(ks[7], (1, dim), jnp.float32),
    }


def prepare_params(raw, num_heads):
    """One-time transform: fold attention scale into W_q/b_q, cast matmul
    weights to bf16 (MXU-native), reshape proj weight to per-head layout."""
    C = raw["qkv_w"].shape[0]
    hd = C // num_heads
    scale = hd ** -0.5
    col_scale = jnp.concatenate(
        [jnp.full((C,), scale, jnp.float32), jnp.ones((2 * C,), jnp.float32)])
    return {
        "ln1_g": raw["ln1_g"].astype(jnp.float32),
        "ln1_b": raw["ln1_b"].astype(jnp.float32),
        "qkv_w": (raw["qkv_w"] * col_scale[None, :]).astype(jnp.bfloat16),
        "qkv_b": (raw["qkv_b"] * col_scale[None, :]).astype(jnp.float32),
        "proj_wh": raw["proj_w"].reshape(num_heads, hd, C).astype(jnp.bfloat16),
        "proj_b": raw["proj_b"].astype(jnp.float32),
        "ln2_g": raw["ln2_g"].astype(jnp.float32),
        "ln2_b": raw["ln2_b"].astype(jnp.float32),
        "mlp_w1": raw["mlp_w1"].astype(jnp.bfloat16),
        "mlp_b1": raw["mlp_b1"].astype(jnp.float32),
        "mlp_w2": raw["mlp_w2"].astype(jnp.bfloat16),
        "mlp_b2": raw["mlp_b2"].astype(jnp.float32),
    }


if __name__ == "__main__":
    # Small shapes consistent with Block(dim=32, num_heads=4, window_size=0)
    B, H, W, C = 2, 8, 8, 32
    num_heads = 4
    mlp_dim = int(C * 4.0)

    key = jax.random.PRNGKey(0)
    kx, kp = jax.random.split(key)
    x = jax.random.normal(kx, (B, H, W, C), jnp.float32)
    params = prepare_params(init_params(kp, C, mlp_dim), num_heads)

    # tile sizes chosen to exercise the multi-tile / online-softmax path (N=64)
    out = block_forward(x, params, num_heads, row_tile=32, q_tile=32, kv_tile=32)
    jax.block_until_ready(out)
    assert out.shape == (B, H, W, C)
    assert bool(jnp.all(jnp.isfinite(out)))
    print("KERNEL_OK")
</pallas_src>

<mosaic_0001>
module attributes {stable_mosaic.version = 11 : i64} {
  func.func @ln_qkv_kernel(%arg0: i32, %arg1: i32, %arg2: memref<1x32x32xf32, #tpu.memory_space<vmem>>, %arg3: memref<1x32xf32, #tpu.memory_space<vmem>>, %arg4: memref<1x32xf32, #tpu.memory_space<vmem>>, %arg5: memref<32x96xbf16, #tpu.memory_space<vmem>>, %arg6: memref<1x96xf32, #tpu.memory_space<vmem>>, %arg7: memref<1x32x96xbf16, #tpu.memory_space<vmem>>) attributes {dimension_semantics = [#tpu.dimension_semantics<parallel>, #tpu.dimension_semantics<parallel>], iteration_bounds = array<i64: 2, 2>, scalar_prefetch = 0 : i64, scratch_operands = 0 : i64, tpu.core_type = #tpu.core_type<tc>, window_params = [{transform_indices = @transform_0, window_bounds = array<i64: 1, 32, 32>}, {pipeline_mode = #tpu.pipeline_mode<synchronous>, transform_indices = @transform_1, window_bounds = array<i64: 1, 32>}, {pipeline_mode = #tpu.pipeline_mode<synchronous>, transform_indices = @transform_2, window_bounds = array<i64: 1, 32>}, {pipeline_mode = #tpu.pipeline_mode<synchronous>, transform_indices = @transform_3, window_bounds = array<i64: 32, 96>}, {pipeline_mode = #tpu.pipeline_mode<synchronous>, transform_indices = @transform_4, window_bounds = array<i64: 1, 96>}, {transform_indices = @transform_5, window_bounds = array<i64: 1, 32, 96>}]} {
    %c0 = arith.constant 0 : index
    %c0_0 = arith.constant 0 : index
    %c0_1 = arith.constant 0 : index
    %0 = vector.load %arg2[%c0, %c0_0, %c0_1] : memref<1x32x32xf32, #tpu.memory_space<vmem>>, vector<1x32x32xf32>
    %1 = vector.shape_cast %0 : vector<1x32x32xf32> to vector<32x32xf32>
    %c0_2 = arith.constant 0 : index
    %c0_3 = arith.constant 0 : index
    %2 = vector.load %arg3[%c0_2, %c0_3] : memref<1x32xf32, #tpu.memory_space<vmem>>, vector<1x32xf32>
    %3 = vector.shape_cast %2 : vector<1x32xf32> to vector<32xf32>
    %c0_4 = arith.constant 0 : index
    %c0_5 = arith.constant 0 : index
    %4 = vector.load %arg4[%c0_4, %c0_5] : memref<1x32xf32, #tpu.memory_space<vmem>>, vector<1x32xf32>
    %5 = vector.shape_cast %4 : vector<1x32xf32> to vector<32xf32>
    %cst = arith.constant dense<0.000000e+00> : vector<32xf32>
    %6 = vector.multi_reduction <add>, %1, %cst [1] : vector<32x32xf32> to vector<32xf32>
    %7 = vector.shape_cast %6 : vector<32xf32> to vector<32x1xf32>
    %cst_6 = arith.constant 3.200000e+01 : f32
    %8 = vector.broadcast %cst_6 : f32 to vector<32x1xf32>
    %9 = arith.divf %7, %8 : vector<32x1xf32>
    %10 = vector.broadcast %9 : vector<32x1xf32> to vector<32x32xf32>
    %11 = arith.subf %1, %10 : vector<32x32xf32>
    %12 = arith.mulf %11, %11 : vector<32x32xf32>
    %cst_7 = arith.constant dense<0.000000e+00> : vector<32xf32>
    %13 = vector.multi_reduction <add>, %12, %cst_7 [1] : vector<32x32xf32> to vector<32xf32>
    %14 = vector.shape_cast %13 : vector<32xf32> to vector<32x1xf32>
    %cst_8 = arith.constant 3.200000e+01 : f32
    %15 = vector.broadcast %cst_8 : f32 to vector<32x1xf32>
    %16 = arith.divf %14, %15 : vector<32x1xf32>
    %cst_9 = arith.constant 9.99999974E-6 : f32
    %17 = vector.broadcast %cst_9 : f32 to vector<32x1xf32>
    %18 = arith.addf %16, %17 : vector<32x1xf32>
    %19 = math.rsqrt %18 : vector<32x1xf32>
    %20 = vector.broadcast %19 : vector<32x1xf32> to vector<32x32xf32>
    %21 = arith.mulf %11, %20 : vector<32x32xf32>
    %22 = vector.shape_cast %3 : vector<32xf32> to vector<1x32xf32>
    %23 = vector.broadcast %22 : vector<1x32xf32> to vector<32x32xf32>
    %24 = arith.mulf %21, %23 : vector<32x32xf32>
    %25 = vector.shape_cast %5 : vector<32xf32> to vector<1x32xf32>
    %26 = vector.broadcast %25 : vector<1x32xf32> to vector<32x32xf32>
    %27 = arith.addf %24, %26 : vector<32x32xf32>
    %28 = arith.truncf %27 : vector<32x32xf32> to vector<32x32xbf16>
    %c0_10 = arith.constant 0 : index
    %c0_11 = arith.constant 0 : index
    %29 = vector.load %arg5[%c0_10, %c0_11] : memref<32x96xbf16, #tpu.memory_space<vmem>>, vector<32x96xbf16>
    %cst_12 = arith.constant dense<0.000000e+00> : vector<32x96xf32>
    %30 = tpu.matmul %28, %29, %cst_12 {dimension_numbers = #tpu.dot_dimension_numbers<[1], [0], [0], [1], [0, 0, 1, 1], [], []>} : vector<32x32xbf16>, vector<32x96xbf16>, vector<32x96xf32> -> vector<32x96xf32>
    %c0_13 = arith.constant 0 : index
    %c0_14 = arith.constant 0 : index
    %31 = vector.load %arg6[%c0_13, %c0_14] : memref<1x96xf32, #tpu.memory_space<vmem>>, vector<1x96xf32>
    %32 = vector.shape_cast %31 : vector<1x96xf32> to vector<96xf32>
    %33 = vector.shape_cast %32 : vector<96xf32> to vector<1x96xf32>
    %34 = vector.broadcast %33 : vector<1x96xf32> to vector<32x96xf32>
    %35 = arith.addf %30, %34 : vector<32x96xf32>
    %36 = arith.truncf %35 : vector<32x96xf32> to vector<32x96xbf16>
    %c0_15 = arith.constant 0 : index
    %c0_16 = arith.constant 0 : index
    %c0_17 = arith.constant 0 : index
    %37 = vector.load %arg7[%c0_15, %c0_16, %c0_17] : memref<1x32x96xbf16, #tpu.memory_space<vmem>>, vector<1x32x96xbf16>
    %38 = vector.shape_cast %37 : vector<1x32x96xbf16> to vector<32x96xbf16>
    %39 = vector.shape_cast %36 : vector<32x96xbf16> to vector<1x32x96xbf16>
    tpu.vector_store %arg7[%c0_15, %c0_16, %c0_17], %39 {strides = array<i32>} : memref<1x32x96xbf16, #tpu.memory_space<vmem>>, vector<1x32x96xbf16>,
    return
  }
  func.func @transform_0(%arg0: i32, %arg1: i32) -> (i32, i32, i32) {
    %c0_i32 = arith.constant 0 : i32
    %c0_i32_0 = arith.constant 0 : i32
    return %arg0, %arg1, %c0_i32 : i32, i32, i32
  }
  func.func @transform_1(%arg0: i32, %arg1: i32) -> (i32, i32) {
    %c0_i32 = arith.constant 0 : i32
    %c0_i32_0 = arith.constant 0 : i32
    %c0_i32_1 = arith.constant 0 : i32
    return %c0_i32, %c0_i32_0 : i32, i32
  }
  func.func @transform_2(%arg0: i32, %arg1: i32) -> (i32, i32) {
    %c0_i32 = arith.constant 0 : i32
    %c0_i32_0 = arith.constant 0 : i32
    %c0_i32_1 = arith.constant 0 : i32
    return %c0_i32, %c0_i32_0 : i32, i32
  }
  func.func @transform_3(%arg0: i32, %arg1: i32) -> (i32, i32) {
    %c0_i32 = arith.constant 0 : i32
    %c0_i32_0 = arith.constant 0 : i32
    %c0_i32_1 = arith.constant 0 : i32
    return %c0_i32, %c0_i32_0 : i32, i32
  }
  func.func @transform_4(%arg0: i32, %arg1: i32) -> (i32, i32) {
    %c0_i32 = arith.constant 0 : i32
    %c0_i32_0 = arith.constant 0 : i32
    %c0_i32_1 = arith.constant 0 : i32
    return %c0_i32, %c0_i32_0 : i32, i32
  }
  func.func @transform_5(%arg0: i32, %arg1: i32) -> (i32, i32, i32) {
    %c0_i32 = arith.constant 0 : i32
    %c0_i32_0 = arith.constant 0 : i32
    return %arg0, %arg1, %c0_i32 : i32, i32, i32
  }
}

</mosaic_0001>

<llo_original>
// kernel: tpu_custom_call.1
$region0: #{tpu_custom_call.1}
  #allocation0 [shape = 'u32[]', space=smem, size = 0x4, offset = 0x4, fixed_abs, tag = 'smem constant byte address 0x4 - core index']
  #allocation1 [shape = 'u32[144,128]{1,0:T(1,128)}', space=vmem, size = 0x12000, scoped, tag = 'internal scratch']
  %s0 = inlined_call_operand.hbm [shape: f32[2,64,32], index: 0, kind: input, shape index: {}]
  %s1 = inlined_call_operand.hbm [shape: f32[1,32], index: 1, kind: input, shape index: {}]
  %s2 = inlined_call_operand.hbm [shape: f32[1,32], index: 2, kind: input, shape index: {}]
  %s3 = inlined_call_operand.hbm [shape: bf16[32,96], index: 3, kind: input, shape index: {}]
  %s4 = inlined_call_operand.hbm [shape: f32[1,96], index: 4, kind: input, shape index: {}]
  %s5 = inlined_call_operand.hbm [shape: bf16[2,64,96], index: 5, kind: output, shape index: {}]
  %s6 = sld [smem:[#allocation0]]
  $region73: #{tpu_custom_call.1} parent=0
    _
  %s8 = ssub.s32 1, %s6
  %s9 = scalar_select 0, %s8, %s6
  $region1: #{tpu_custom_call.1} parent=0
    #allocation2 [shape = 'u8[32768]{0}', space=vmem, size = 0x8000, scoped, tag = 'input window, operand 0']
    #allocation3 [shape = 's32[2]{0}', space=sflag, size = 0x8, scoped, tag = 'scoped memory for tpu_custom_call.1']
    #allocation4 [shape = 's32[2]{0}', space=sflag, size = 0x8, scoped, tag = 'scoped memory for tpu_custom_call.1']
    #allocation5 [shape = 'u8[512]{0}', space=vmem, size = 0x400, scoped, tag = 'input window, operand 1, single buffered']
    #allocation6 [shape = 's32[1]{0}', space=sflag, size = 0x4, scoped, tag = 'scoped memory for tpu_custom_call.1']
    #allocation7 [shape = 'u8[512]{0}', space=vmem, size = 0x400, scoped, tag = 'input window, operand 2, single buffered']
    #allocation8 [shape = 'u8[8192]{0}', space=vmem, size = 0x2000, scoped, tag = 'input window, operand 3, single buffered']
    #allocation9 [shape = 's32[1]{0}', space=sflag, size = 0x4, scoped, tag = 'scoped memory for tpu_custom_call.1']
    #allocation10 [shape = 'u8[512]{0}', space=vmem, size = 0x400, scoped, tag = 'input window, operand 4, single buffered']
    #allocation11 [shape = 'u8[16384]{0}', space=vmem, size = 0x4000, scoped, tag = 'output window, operand 0']
    %10 = vsyncpa [#allocation3], 0
    %s11 = scalar_lea.sflag [#allocation3], 1
    %12 = vsyncpa %s11, 0
    %13 = vsyncpa [#allocation6], 0
    %14 = vsyncpa [#allocation9], 0
    %15 = vsyncpa [#allocation4], 0
    %s16 = scalar_lea.sflag [#allocation4], 1
    %17 = vsyncpa %s16, 0
    loop: start=0, step=1, limit=6
    $region2: #{tpu_custom_call.1} parent=1 // loop_pre_header
      _
    $region3: #{tpu_custom_call.1} parent=1 // loop_header
      %s19 = sphi 0, %s23
      %p20 = scmp.ge.s32.totalorder %s19, 6
      %s26 = sphi 0, %s38
      %s27 = sphi 0, %s34
      %s28 = sphi 0, %s26
      %s29 = sphi 0, %s27
      %s30 = sphi 0, %s28
      %s31 = sphi 0, %s29
      %s43 = sphi 0, %s45
      %s46 = sphi 0, %s43
      %s47 = sphi 0, %s46
      %s63 = sphi 0, %s47
      %s67 = sphi 0, %s67
      %s69 = sphi 0, %s67
      %s70 = sphi 0, %s69
      %s84 = sphi 0, %s70
      %s88 = sphi 0, %s88
      %s90 = sphi 0, %s88
      %s91 = sphi 0, %s90
      %s105 = sphi 0, %s91
      %s109 = sphi 0, %s109
      %s111 = sphi 0, %s109
      %s112 = sphi 0, %s111
      %s126 = sphi 0, %s112
      %s130 = sphi 0, %s130
      %s132 = sphi 0, %s130
      %s133 = sphi 0, %s132
      %s147 = sphi 0, %s133
      %s155 = sphi 0, %s157
      %s158 = sphi 0, %s155
      %s159 = sphi 0, %s158
      %s175 = sphi 0, %s159
    $region4: #{tpu_custom_call.1} parent=1 // loop_header_branch
      %22 = sbr.rel (%p20) target = $region8
    $region5: #{tpu_custom_call.1} parent=1 // loop_body
      %s24 = ssub.s32 %s19, 1
      %s25 = ssub.s32 %s19, 2
      %s32 = sadd.s32 1, %s27
      %p33 = scmp.ge.s32.totalorder %s32, 2
      %s34 = scalar_select %p33, 0, %s32
      %s35 = sadd.s32 1, %s26
      %s36 = scalar_select %p33, %s35, %s26
      %p37 = scmp.ge.s32.totalorder %s36, 2
      %s38 = scalar_select %p37, 0, %s36
      %s39 = ssub.s32 %s26, %s38
      %s40 = ssub.s32 %s27, %s34
      %s41 = sor.u32 %s39, %s40
      %p42 = scmp.eq.s32.totalorder %s41, 0
      %s44 = sadd.s32 %s43, 1
      %s45 = scalar_select %p42, %s43, %s44
      %p48 = pneg %p42
      %p49 = scmp.eq.s32.totalorder %s19, 3
      %p50 = por %p48, %p49
      %p51 = scmp.ne.s32.totalorder %s43, %s46
      %p52 = scmp.eq.s32.totalorder %s19, 0
      %p53 = por %p51, %p52
      %p54 = scmp.ne.s32.totalorder %s43, %s46
      %p55 = scmp.eq.s32.totalorder %s24, 3
      %p56 = por %p54, %p55
      %p57 = scmp.ne.s32.totalorder %s46, %s47
      %p58 = scmp.eq.s32.totalorder %s24, 0
      %p59 = por %p57, %p58
      %p60 = scmp.ne.s32.totalorder %s46, %s47
      %p61 = scmp.eq.s32.totalorder %s25, 3
      %p62 = por %p60, %p61
      %p64 = scmp.ne.s32.totalorder %s47, %s63
      %p65 = scmp.eq.s32.totalorder %s25, 0
      %p66 = por %p64, %p65
      %s68 = sadd.s32 %s67, 1
      %p71 = scmp.eq.s32.totalorder %s19, 3
      %p72 = scmp.ne.s32.totalorder %s67, %s69
      %p73 = scmp.eq.s32.totalorder %s19, 0
      %p74 = por %p72, %p73
      %p75 = scmp.ne.s32.totalorder %s67, %s69
      %p76 = scmp.eq.s32.totalorder %s24, 3
      %p77 = por %p75, %p76
      %p78 = scmp.ne.s32.totalorder %s69, %s70
      %p79 = scmp.eq.s32.totalorder %s24, 0
      %p80 = por %p78, %p79
      %p81 = scmp.ne.s32.totalorder %s69, %s70
      %p82 = scmp.eq.s32.totalorder %s25, 3
      %p83 = por %p81, %p82
      %p85 = scmp.ne.s32.totalorder %s70, %s84
      %p86 = scmp.eq.s32.totalorder %s25, 0
      %p87 = por %p85, %p86
      %s89 = sadd.s32 %s88, 1
      %p92 = scmp.eq.s32.totalorder %s19, 3
      %p93 = scmp.ne.s32.totalorder %s88, %s90
      %p94 = scmp.eq.s32.totalorder %s19, 0
      %p95 = por %p93, %p94
      %p96 = scmp.ne.s32.totalorder %s88, %s90
      %p97 = scmp.eq.s32.totalorder %s24, 3
      %p98 = por %p96, %p97
      %p99 = scmp.ne.s32.totalorder %s90, %s91
      %p100 = scmp.eq.s32.totalorder %s24, 0
      %p101 = por %p99, %p100
      %p102 = scmp.ne.s32.totalorder %s90, %s91
      %p103 = scmp.eq.s32.totalorder %s25, 3
      %p104 = por %p102, %p103
      %p106 = scmp.ne.s32.totalorder %s91, %s105
      %p107 = scmp.eq.s32.totalorder %s25, 0
      %p108 = por %p106, %p107
      %s110 = sadd.s32 %s109, 1
      %p113 = scmp.eq.s32.totalorder %s19, 3
      %p114 = scmp.ne.s32.totalorder %s109, %s111
      %p115 = scmp.eq.s32.totalorder %s19, 0
      %p116 = por %p114, %p115
      %p117 = scmp.ne.s32.totalorder %s109, %s111
      %p118 = scmp.eq.s32.totalorder %s24, 3
      %p119 = por %p117, %p118
      %p120 = scmp.ne.s32.totalorder %s111, %s112
      %p121 = scmp.eq.s32.totalorder %s24, 0
      %p122 = por %p120, %p121
      %p123 = scmp.ne.s32.totalorder %s111, %s112
      %p124 = scmp.eq.s32.totalorder %s25, 3
      %p125 = por %p123, %p124
      %p127 = scmp.ne.s32.totalorder %s112, %s126
      %p128 = scmp.eq.s32.totalorder %s25, 0
      %p129 = por %p127, %p128
      %s131 = sadd.s32 %s130, 1
      %p134 = scmp.eq.s32.totalorder %s19, 3
      %p135 = scmp.ne.s32.totalorder %s130, %s132
      %p136 = scmp.eq.s32.totalorder %s19, 0
      %p137 = por %p135, %p136
      %p138 = scmp.ne.s32.totalorder %s130, %s132
      %p139 = scmp.eq.s32.totalorder %s24, 3
      %p140 = por %p138, %p139
      %p141 = scmp.ne.s32.totalorder %s132, %s133
      %p142 = scmp.eq.s32.totalorder %s24, 0
      %p143 = por %p141, %p142
      %p144 = scmp.ne.s32.totalorder %s132, %s133
      %p145 = scmp.eq.s32.totalorder %s25, 3
      %p146 = por %p144, %p145
      %p148 = scmp.ne.s32.totalorder %s133, %s147
      %p149 = scmp.eq.s32.totalorder %s25, 0
      %p150 = por %p148, %p149
      %s151 = ssub.s32 %s26, %s38
      %s152 = ssub.s32 %s27, %s34
      %s153 = sor.u32 %s151, %s152
      %p154 = scmp.eq.s32.totalorder %s153, 0
      %s156 = sadd.s32 %s155, 1
      %s157 = scalar_select %p154, %s155, %s156
      %p160 = pneg %p154
      %p161 = scmp.eq.s32.totalorder %s19, 3
      %p162 = por %p160, %p161
      %p163 = scmp.ne.s32.totalorder %s155, %s158
      %p164 = scmp.eq.s32.totalorder %s19, 0
      %p165 = por %p163, %p164
      %p166 = scmp.ne.s32.totalorder %s155, %s158
      %p167 = scmp.eq.s32.totalorder %s24, 3
      %p168 = por %p166, %p167
      %p169 = scmp.ne.s32.totalorder %s158, %s159
      %p170 = scmp.eq.s32.totalorder %s24, 0
      %p171 = por %p169, %p170
      %p172 = scmp.ne.s32.totalorder %s158, %s159
      %p173 = scmp.eq.s32.totalorder %s25, 3
      %p174 = por %p172, %p173
      %p176 = scmp.ne.s32.totalorder %s159, %s175
      %p177 = scmp.eq.s32.totalorder %s25, 0
      %p178 = por %p176, %p177
      %p179 = scmp.le.s32.totalorder 1, %s19
      %p180 = scmp.lt.s32.totalorder %s19, 5
      %p181 = pnand %p179, %p180
      %p182 = pneg %p181
      // Predicated region
      $region9: #{tpu_custom_call.1} parent=5 // pred_check
        _
      $region10: #{tpu_custom_call.1} parent=5 // pred_check_branch
        %184 = sbr.rel (%p181) target = $region12
      $region11: #{tpu_custom_call.1} parent=5 // pred_region
        %s185 = ssub.s32 %s19, 1
        // Predicated region
        $region13: #{tpu_custom_call.1} parent=11 // pred_check
          %p186 = pneg %p80
        $region14: #{tpu_custom_call.1} parent=11 // pred_check_branch
          %188 = sbr.rel (%p186) target = $region16
        $region15: #{tpu_custom_call.1} parent=11 // pred_region
          %s190 = ssub.s32 16, 16
          %191 = vsyncadd [#allocation6], %s190
          %s193 = sshll.u32 [#allocation5], 4
          %s194 = int_to_ptr.vmem [resolvable:$true] %s193
          %196 = dma.hbm_to_vmem [thread:$0]  %s1, 16, %s194, [#allocation6]
        $region16: #{tpu_custom_call.1} parent=11 // pred_fallthru
          _
        // Predicated region
        $region17: #{tpu_custom_call.1} parent=11 // pred_check
          %p197 = pneg %p101
        $region18: #{tpu_custom_call.1} parent=11 // pred_check_branch
          %199 = sbr.rel (%p197) target = $region20
        $region19: #{tpu_custom_call.1} parent=11 // pred_region
          %s201 = ssub.s32 16, 16
          %202 = vsyncadd [#allocation6], %s201
          %s204 = sshll.u32 [#allocation7], 4
          %s205 = int_to_ptr.vmem [resolvable:$true] %s204
          %207 = dma.hbm_to_vmem [thread:$0]  %s2, 16, %s205, [#allocation6]
        $region20: #{tpu_custom_call.1} parent=11 // pred_fallthru
          _
        // Predicated region
        $region21: #{tpu_custom_call.1} parent=11 // pred_check
          %p208 = pneg %p122
        $region22: #{tpu_custom_call.1} parent=11 // pred_check_branch
          %210 = sbr.rel (%p208) target = $region24
        $region23: #{tpu_custom_call.1} parent=11 // pred_region
          %s212 = ssub.s32 256, 256
          %213 = vsyncadd [#allocation9], %s212
          %s214 = sshll.u32 [#allocation8], 4
          %s215 = int_to_ptr.vmem [resolvable:$true] %s214
          %220 = dma.hbm_to_vmem [thread:$0]  %s3, 256, %s215, [#allocation9], 64, 64, 4
        $region24: #{tpu_custom_call.1} parent=11 // pred_fallthru
          _
        // Predicated region
        $region25: #{tpu_custom_call.1} parent=11 // pred_check
          %p221 = pneg %p143
        $region26: #{tpu_custom_call.1} parent=11 // pred_check_branch
          %223 = sbr.rel (%p221) target = $region28
        $region27: #{tpu_custom_call.1} parent=11 // pred_region
          %s225 = ssub.s32 16, 16
          %226 = vsyncadd [#allocation9], %s225
          %s228 = sshll.u32 [#allocation10], 4
          %s229 = int_to_ptr.vmem [resolvable:$true] %s228
          %231 = dma.hbm_to_vmem [thread:$0]  %s4, 16, %s229, [#allocation9]
        $region28: #{tpu_custom_call.1} parent=11 // pred_fallthru
          _
      $region12: #{tpu_custom_call.1} parent=5 // pred_fallthru
        _
      %p232 = scmp.lt.s32.totalorder %s19, 4
      // Predicated region
      $region29: #{tpu_custom_call.1} parent=5 // pred_check
        %p233 = pneg %p232
      $region30: #{tpu_custom_call.1} parent=5 // pred_check_branch
        %235 = sbr.rel (%p233) target = $region32
      $region31: #{tpu_custom_call.1} parent=5 // pred_region
        // Predicated region
        $region33: #{tpu_custom_call.1} parent=31 // pred_check
          %p236 = pneg %p53
        $region34: #{tpu_custom_call.1} parent=31 // pred_check_branch
          %238 = sbr.rel (%p236) target = $region36
        $region35: #{tpu_custom_call.1} parent=31 // pred_region
          %s239 = sand.u32 %s43, 1
          %s240 = scalar_lea.sflag [#allocation3], %s239
          %s241 = sand.u32 %s43, 1
          %s242 = smul.addr %s241, 32
          %s243 = scalar_lea.vmem [#allocation2], %s242
          %s244 = smul.u32 4, %s27
          %s246 = ssub.s32 512, 512
          %247 = vsyncadd %s240, %s246
          %s248 = smul.addr %s26, 8
          %s249 = sadd.s32 %s244, %s248
          %s250 = smul.addr %s249, 128
          %s251 = scalar_lea.hbm %s0, %s250
          %s252 = sshll.u32 %s243, 4
          %s253 = int_to_ptr.vmem [resolvable:$true] %s252
          %258 = dma.hbm_to_vmem [thread:$0]  %s251, 512, %s253, %s240, 128, 128, 8
        $region36: #{tpu_custom_call.1} parent=31 // pred_fallthru
          _
      $region32: #{tpu_custom_call.1} parent=5 // pred_fallthru
        _
      %p259 = scmp.le.s32.totalorder 1, %s19
      %p260 = scmp.lt.s32.totalorder %s19, 5
      %p261 = pnand %p259, %p260
      %p262 = pneg %p261
      // Predicated region
      $region37: #{tpu_custom_call.1} parent=5 // pred_check
        _
      $region38: #{tpu_custom_call.1} parent=5 // pred_check_branch
        %264 = sbr.rel (%p261) target = $region40
      $region39: #{tpu_custom_call.1} parent=5 // pred_region
        %s265 = ssub.s32 %s19, 1
        %s266 = sand.u32 %s46, 1
        %s267 = scalar_lea.sflag [#allocation3], %s266
        %s268 = sand.u32 %s46, 1
        %s269 = smul.addr %s268, 32
        %s270 = scalar_lea.vmem [#allocation2], %s269
        // Predicated region
        $region41: #{tpu_custom_call.1} parent=39 // pred_check
          %p271 = pneg %p59
        $region42: #{tpu_custom_call.1} parent=39 // pred_check_branch
          %273 = sbr.rel (%p271) target = $region44
        $region43: #{tpu_custom_call.1} parent=39 // pred_region
          %274 = dma.done %s267, 512
        $region44: #{tpu_custom_call.1} parent=39 // pred_fallthru
          _
        // Predicated region
        $region45: #{tpu_custom_call.1} parent=39 // pred_check
          %p275 = pneg %p80
        $region46: #{tpu_custom_call.1} parent=39 // pred_check_branch
          %277 = sbr.rel (%p275) target = $region48
        $region47: #{tpu_custom_call.1} parent=39 // pred_region
          %278 = dma.done [#allocation6], 16
        $region48: #{tpu_custom_call.1} parent=39 // pred_fallthru
          _
        // Predicated region
        $region49: #{tpu_custom_call.1} parent=39 // pred_check
          %p279 = pneg %p101
        $region50: #{tpu_custom_call.1} parent=39 // pred_check_branch
          %281 = sbr.rel (%p279) target = $region52
        $region51: #{tpu_custom_call.1} parent=39 // pred_region
          %282 = dma.done [#allocation6], 16
        $region52: #{tpu_custom_call.1} parent=39 // pred_fallthru
          _
        // Predicated region
        $region53: #{tpu_custom_call.1} parent=39 // pred_check
          %p283 = pneg %p122
        $region54: #{tpu_custom_call.1} parent=39 // pred_check_branch
          %285 = sbr.rel (%p283) target = $region56
        $region55: #{tpu_custom_call.1} parent=39 // pred_region
          %286 = dma.done [#allocation9], 256
        $region56: #{tpu_custom_call.1} parent=39 // pred_fallthru
          _
        // Predicated region
        $region57: #{tpu_custom_call.1} parent=39 // pred_check
          %p287 = pneg %p143
        $region58: #{tpu_custom_call.1} parent=39 // pred_check_branch
          %289 = sbr.rel (%p287) target = $region60
        $region59: #{tpu_custom_call.1} parent=39 // pred_region
          %290 = dma.done [#allocation9], 16
        $region60: #{tpu_custom_call.1} parent=39 // pred_fallthru
          _
        %s291 = sand.u32 %s46, 1
        %s292 = scalar_lea.sflag [#allocation3], %s291
        %s293 = sand.u32 %s46, 1
        %s294 = smul.addr %s293, 32
        %s295 = scalar_lea.vmem [#allocation2], %s294
        %p296 = pneg %p59
        %p297 = pneg %p56
        %p298 = pneg %p80
        %p299 = pneg %p77
        %p300 = pneg %p101
        %p301 = pneg %p98
        %p302 = pneg %p122
        %p303 = pneg %p119
        %p304 = pneg %p143
        %p305 = pneg %p140
        %p306 = pneg %p171
        %p307 = pneg %p168
        %s308 = sand.u32 %s158, 1
        %s309 = scalar_lea.sflag [#allocation4], %s308
        %s310 = sand.u32 %s158, 1
        %s311 = smul.addr %s310, 16
        %s312 = scalar_lea.vmem [#allocation11], %s311
        %s313 = smul.u32 4, %s29
        %s314 = smul.u32 4, %s29
        %v316 = vld [vmem:[%s270] sm:$0xff]
        %v317 = vld [vmem:[%s270 + $0x8] sm:$0xff]
        %v318 = vld [vmem:[%s270 + $0x10] sm:$0xff]
        %v319 = vld [vmem:[%s270 + $0x18] sm:$0xff]
        %v320 = vld [vmem:[#allocation5] sm:$0x1]
        %v321 = vld [vmem:[#allocation7] sm:$0x1]
        %vm322 = vcmask 261120
        %v323 = vsel %vm322, %v316, 0.0
        %324 = vadd.xlane.f32.xlu0 %v323
        %v325 = vpop.xlane.xlu0 %324
        %v326 = vsel %vm322, %v317, 0.0
        %327 = vadd.xlane.f32.xlu0 %v326
        %v328 = vpop.xlane.xlu0 %327
        %v329 = vsel %vm322, %v318, 0.0
        %330 = vadd.xlane.f32.xlu0 %v329
        %v331 = vpop.xlane.xlu0 %330
        %v332 = vsel %vm322, %v319, 0.0
        %333 = vadd.xlane.f32.xlu0 %v332
        %v334 = vpop.xlane.xlu0 %333
        %v335 = vrcp.pop 32.0
        %v336 = vmul.f32 %v325, %v335
        %v337 = vmul.f32 %v328, %v335
        %v338 = vmul.f32 %v331, %v335
        %v339 = vmul.f32 %v334, %v335
        %v340 = vsub.f32 %v316, %v336
        %v341 = vsub.f32 %v317, %v337
        %v342 = vsub.f32 %v318, %v338
        %v343 = vsub.f32 %v319, %v339
        %v344 = vmul.f32 %v340, %v340
        %v345 = vmul.f32 %v341, %v341
        %v346 = vmul.f32 %v342, %v342
        %v347 = vmul.f32 %v343, %v343
        %v348 = vsel %vm322, %v344, 0.0
        %349 = vadd.xlane.f32.xlu0 %v348
        %v350 = vpop.xlane.xlu0 %349
        %v351 = vsel %vm322, %v345, 0.0
        %352 = vadd.xlane.f32.xlu0 %v351
        %v353 = vpop.xlane.xlu0 %352
        %v354 = vsel %vm322, %v346, 0.0
        %355 = vadd.xlane.f32.xlu0 %v354
        %v356 = vpop.xlane.xlu0 %355
        %v357 = vsel %vm322, %v347, 0.0
        %358 = vadd.xlane.f32.xlu0 %v357
        %v359 = vpop.xlane.xlu0 %358
        %v360 = vmul.f32 %v350, %v335
        %v361 = vmul.f32 %v353, %v335
        %v362 = vmul.f32 %v356, %v335
        %v363 = vmul.f32 %v359, %v335
        %v364 = vadd.f32 %v360, 1e-05
        %v365 = vadd.f32 %v361, 1e-05
        %v366 = vadd.f32 %v362, 1e-05
        %v367 = vadd.f32 %v363, 1e-05
        %v368 = vrsqrt.pop %v364
        %v369 = vrsqrt.pop %v365
        %v370 = vrsqrt.pop %v366
        %v371 = vrsqrt.pop %v367
        %v372 = vmul.f32 %v340, %v368
        %v373 = vmul.f32 %v341, %v369
        %v374 = vmul.f32 %v342, %v370
        %v375 = vmul.f32 %v343, %v371
        %v377 = vlaneseq
        %v378 = vshrl.u32 %v377, 7
        %v379 = vsub.s32 0, %v378
        %v380 = vrot.slane %v320, %v379
        %v382 = vmul.f32 %v372, %v380
        %v383 = vmul.f32 %v373, %v380
        %v384 = vmul.f32 %v374, %v380
        %v385 = vmul.f32 %v375, %v380
        %v387 = vlaneseq
        %v388 = vshrl.u32 %v387, 7
        %v389 = vsub.s32 0, %v388
        %v390 = vrot.slane %v321, %v389
        %v392 = vadd.f32 %v382, %v390
        %v393 = vadd.f32 %v383, %v390
        %v394 = vadd.f32 %v384, %v390
        %v395 = vadd.f32 %v385, %v390
        %v396 = vpack.c.bf16 %v393, %v392
        %v397 = vpack.c.bf16 %v395, %v394
        %v398 = vld [vmem:[#allocation8] sm:$0xf]
        %v399 = vld [vmem:[#allocation8 + $0x4] sm:$0xf]
        %v400 = vld [vmem:[#allocation8 + $0x8] sm:$0xf]
        %v401 = vld [vmem:[#allocation8 + $0xc] sm:$0xf]
        %v402 = vld [vmem:[#allocation10] sm:$0x1]
        %v404 = vlaneseq
        %v405 = vshrl.u32 %v404, 7
        %v406 = vsub.s32 0, %v405
        %v407 = vrot.slane %v402, %v406
        %v413 = vunpack.c.l.b16 %v398
        %v414 = vunpack.c.l.b16 %v399
        %v415 = vunpack.c.l.b16 %v400
        %v416 = vunpack.c.l.b16 %v401
        %v417 = vpack.c.b16 %v414, %v413
        %v418 = vpack.c.b16 %v416, %v415
        %v422 = vsel %vm322, %v396, 0
        %v425 = vsel %vm322, %v397, 0
        %427 = vmatprep.subr.bf16.mxu0 0
        %428 = vmatpush1.bf16.msra.mxu0 %v417
        %429 = vmatprep.subr.bf16.mxu0 0
        %430 = vmatpush1.bf16.msra.mxu0 %v418
        %431 = vmatprep.subr.bf16.mxu0 0
        %432 = vmatpush1.bf16.msra.mxu0 0
        %433 = vmatprep.subr.bf16.mxu0 0
        %434 = vmatpush1.bf16.msra.mxu0 0
        %435 = vmatprep.subr.bf16.mxu0 0
        %436 = vmatpush1.bf16.msra.mxu0 0
        %437 = vmatprep.subr.bf16.mxu0 0
        %438 = vmatpush1.bf16.msra.mxu0 0
        %439 = vmatprep.subr.bf16.mxu0 0
        %440 = vmatpush1.bf16.msra.mxu0 0
        %441 = vmatprep.subr.bf16.mxu0 0
        %442 = vmatpush1.bf16.msra.mxu0 0
        %443 = vmatprep.subr.bf16.mxu0 0
        %444 = vmatpush1.bf16.msra.mxu0 0
        %445 = vmatprep.subr.bf16.mxu0 0
        %446 = vmatpush1.bf16.msra.mxu0 0
        %447 = vmatprep.subr.bf16.mxu0 0
        %448 = vmatpush1.bf16.msra.mxu0 0
        %449 = vmatprep.subr.bf16.mxu0 0
        %450 = vmatpush1.bf16.msra.mxu0 0
        %451 = vmatprep.subr.bf16.mxu0 0
        %452 = vmatpush1.bf16.msra.mxu0 0
        %453 = vmatprep.subr.bf16.mxu0 0
        %454 = vmatpush1.bf16.msra.mxu0 0
        %455 = vmatprep.subr.bf16.mxu0 0
        %456 = vmatpush1.bf16.msra.mxu0 0
        %457 = vmatprep.subr.bf16.mxu0 0
        %458 = vmatpush1.bf16.msra.mxu0 0
        %459 = vmatprep.mubr.bf16.mxu0 0
        %460 = vmatmul.mubr.bf16.gmra.mrb[0].mxu0 %v422
        %v461 = vpop.f32.mrb[0].mxu0
        %v462 = vadd.f32 %v407, %v461
        %v463 = vpop.f32.mrb[0].mxu0
        %v464 = vpop.f32.mrb[0].mxu0
        %v465 = vadd.f32 %v407, %v464
        %v466 = vpop.f32.mrb[0].mxu0
        %467 = vmatprep.mubr.bf16.mxu0 0
        %468 = vmatmul.mubr.bf16.gmra.mrb[0].mxu0 %v425
        %v469 = vpop.f32.mrb[0].mxu0
        %v470 = vadd.f32 %v407, %v469
        %v471 = vpop.f32.mrb[0].mxu0
        %v472 = vpop.f32.mrb[0].mxu0
        %v473 = vadd.f32 %v407, %v472
        %v474 = vpop.f32.mrb[0].mxu0
        %475 = vdwg.mxu0
        %v476 = vpack.c.bf16 %v465, %v462
        %v477 = vpack.c.bf16 %v473, %v470
        %v480 = vunpack.c.l.b16 %v476
        %v481 = vunpack.c.h.b16 %v476
        %v482 = vunpack.c.l.b16 %v477
        %v483 = vunpack.c.h.b16 %v477
        %v484 = vpack.c.b16 %v480, %v480
        %v485 = vpack.c.b16 %v481, %v481
        %v486 = vpack.c.b16 %v482, %v482
        %v487 = vpack.c.b16 %v483, %v483
        %vm492 = vcmask 781312
        %493 = vst.msk [vmem:[%s312] sm:$0xf] %vm492, %v484
        %494 = vst.msk [vmem:[%s312 + $0x4] sm:$0xf] %vm492, %v485
        %495 = vst.msk [vmem:[%s312 + $0x8] sm:$0xf] %vm492, %v486
        %496 = vst.msk [vmem:[%s312 + $0xc] sm:$0xf] %vm492, %v487
        %s497 = sand.u32 %s158, 1
        %s498 = scalar_lea.sflag [#allocation4], %s497
        %s499 = sand.u32 %s158, 1
        %s500 = smul.addr %s499, 16
        %s501 = scalar_lea.vmem [#allocation11], %s500
        // Predicated region
        $region61: #{tpu_custom_call.1} parent=39 // pred_check
          %p502 = pneg %p168
        $region62: #{tpu_custom_call.1} parent=39 // pred_check_branch
          %504 = sbr.rel (%p502) target = $region64
        $region63: #{tpu_custom_call.1} parent=39 // pred_region
          %s505 = smul.u32 4, %s29
          %s507 = ssub.s32 256, 256
          %508 = vsyncadd %s498, %s507
          %s509 = smul.addr %s28, 8
          %s510 = sadd.s32 %s505, %s509
          %s511 = smul.addr %s510, 64
          %s512 = scalar_lea.hbm %s5, %s511
          %s513 = sshll.u32 %s501, 4
          %s514 = int_to_ptr.vmem [resolvable:$true] %s513
          %519 = dma.vmem_to_hbm [thread:$0]  %s514, 256, %s512, %s498, 64, 64, 4
        $region64: #{tpu_custom_call.1} parent=39 // pred_fallthru
          _
      $region40: #{tpu_custom_call.1} parent=5 // pred_fallthru
        _
      %p520 = scmp.le.s32.totalorder 2, %s19
      // Predicated region
      $region65: #{tpu_custom_call.1} parent=5 // pred_check
        %p521 = pneg %p520
      $region66: #{tpu_custom_call.1} parent=5 // pred_check_branch
        %523 = sbr.rel (%p521) target = $region68
      $region67: #{tpu_custom_call.1} parent=5 // pred_region
        %s524 = ssub.s32 %s19, 2
        // Predicated region
        $region69: #{tpu_custom_call.1} parent=67 // pred_check
          %p525 = pneg %p174
        $region70: #{tpu_custom_call.1} parent=67 // pred_check_branch
          %527 = sbr.rel (%p525) target = $region72
        $region71: #{tpu_custom_call.1} parent=67 // pred_region
          %s528 = sand.u32 %s159, 1
          %s529 = scalar_lea.sflag [#allocation4], %s528
          %s530 = sand.u32 %s159, 1
          %s531 = smul.addr %s530, 16
          %s532 = scalar_lea.vmem [#allocation11], %s531
          %533 = dma.done %s529, 256
        $region72: #{tpu_custom_call.1} parent=67 // pred_fallthru
          _
      $region68: #{tpu_custom_call.1} parent=5 // pred_fallthru
        _
    $region6: #{tpu_custom_call.1} parent=1 // loop_footer
      %s23 = sadd.s32 1, %s19
    $region7: #{tpu_custom_call.1} parent=1 // loop_footer_branch
      %18 = sbr.rel target = $region3
    $region8: #{tpu_custom_call.1} parent=1 // loop_exit
      _
    %534 = vsyncpa [#allocation3], 1
    %s535 = scalar_lea.sflag [#allocation3], 1
    %536 = vsyncpa %s535, 1
    %537 = vsyncpa [#allocation6], 1
    %538 = vsyncpa [#allocation9], 1
    %539 = vsyncpa [#allocation4], 1
    %s540 = scalar_lea.sflag [#allocation4], 1
    %541 = vsyncpa %s540, 1

</llo_original>
